<compile_context>
chip_gen: v5e
topology: v5e:2x2
jax: 0.10.0
libtpu: 0.0.40
codegen_flags: <defaults>
</compile_context>

<pallas_src>
import functools

import jax
import jax.numpy as jnp
from jax import lax
from jax.experimental import pallas as pl
from jax.experimental.pallas import tpu as pltpu

LANE = 128


def _round_up(x, m):
    return ((x + m - 1) // m) * m


def _pad2d(a, rows, cols):
    return jnp.pad(a, ((0, rows - a.shape[0]), (0, cols - a.shape[1])))


def _mlp_kernel(x_ref, w1_ref, b1_ref, w2_ref, b2_ref, w3_ref, b3_ref, o_ref,
                *, row_chunk):
    # Hoist weights / biases once per grid step (constant index_maps -> resident).
    w1 = w1_ref[...]
    w2 = w2_ref[...]
    w3 = w3_ref[...]
    b1 = b1_ref[...]
    b2 = b2_ref[...]
    b3 = b3_ref[...]

    n_chunks = x_ref.shape[0] // row_chunk

    def body(c, carry):
        r0 = pl.multiple_of(c * row_chunk, row_chunk)
        xc = x_ref[pl.ds(r0, row_chunk), :]
        # Layer 1: Linear (+ folded BN1) + ReLU   (dropout = identity, eval mode)
        h1 = jnp.dot(xc, w1, preferred_element_type=jnp.float32)
        h1 = jnp.maximum(h1 + b1, 0.0).astype(w2.dtype)
        # Layer 2: Linear (+ folded BN2) + ReLU   (dropout = identity, eval mode)
        h2 = jnp.dot(h1, w2, preferred_element_type=jnp.float32)
        h2 = jnp.maximum(h2 + b2, 0.0).astype(w3.dtype)
        # Layer 3: Linear (logits), lane-dense (128-wide) store
        out = jnp.dot(h2, w3, preferred_element_type=jnp.float32) + b3
        o_ref[pl.ds(r0, row_chunk), :] = out.astype(o_ref.dtype)
        return carry

    lax.fori_loop(0, n_chunks, body, None, unroll=True)


def node_classifier_forward(x, params, *, tile_m=512, row_chunk=128,
                            use_bf16=True):
    """x: [N, D_in] float32.  params: dict of BN-folded weights/biases (f32)."""
    N, d_in = x.shape
    w1, b1 = params["w1"], params["b1"]   # [D_in, H1], [1, H1]
    w2, b2 = params["w2"], params["b2"]   # [H1, H2],   [1, H2]
    w3, b3 = params["w3"], params["b3"]   # [H2, D_out],[1, D_out]
    h1, h2, d_out = w1.shape[1], w2.shape[1], w3.shape[1]

    assert tile_m % row_chunk == 0, "tile_m must be a multiple of row_chunk"

    # --- Lane-pad hidden and output feature dims to 128 (exact: zeros). ---
    h1p = _round_up(h1, LANE)
    h2p = _round_up(h2, LANE)
    d_out_p = _round_up(d_out, LANE)
    w1p = _pad2d(w1, d_in, h1p)
    b1p = _pad2d(b1, 1, h1p)
    w2p = _pad2d(w2, h1p, h2p)
    b2p = _pad2d(b2, 1, h2p)
    w3p = _pad2d(w3, h2p, d_out_p)
    b3p = _pad2d(b3, 1, d_out_p)

    # --- Row-pad x to a tile multiple; shrink the tile for small N so the
    # demo runs as a single grid step.  (For v7x megacore, pick tile_m so the
    # grid length is a multiple of 2 when N is large.) ---
    tile_m_eff = min(tile_m, _round_up(N, row_chunk))
    n_pad = _round_up(N, tile_m_eff)
    xp = jnp.pad(x, ((0, n_pad - N), (0, 0)))

    in_dtype = jnp.bfloat16 if use_bf16 else x.dtype
    xp = xp.astype(in_dtype)
    w1p, w2p, w3p = (w.astype(in_dtype) for w in (w1p, w2p, w3p))
    # Biases stay f32: the bias-add / ReLU epilogue is done in f32.

    grid = (n_pad // tile_m_eff,)
    full = lambda i: (0, 0)

    flops = 2 * n_pad * (d_in * h1p + h1p * h2p + h2p * d_out_p)
    bytes_accessed = (
        xp.size * xp.dtype.itemsize
        + sum(a.size * a.dtype.itemsize
              for a in (w1p, b1p, w2p, b2p, w3p, b3p))
        + n_pad * d_out_p * 4)

    out_padded = pl.pallas_call(
        functools.partial(_mlp_kernel, row_chunk=row_chunk),
        out_shape=jax.ShapeDtypeStruct((n_pad, d_out_p), jnp.float32),
        grid_spec=pltpu.PrefetchScalarGridSpec(
            num_scalar_prefetch=0,
            grid=grid,
            in_specs=[
                pl.BlockSpec((tile_m_eff, d_in), lambda i: (i, 0)),  # x row tile
                pl.BlockSpec((d_in, h1p), full),
                pl.BlockSpec((1, h1p), full),
                pl.BlockSpec((h1p, h2p), full),
                pl.BlockSpec((1, h2p), full),
                pl.BlockSpec((h2p, d_out_p), full),
                pl.BlockSpec((1, d_out_p), full),
            ],
            out_specs=pl.BlockSpec((tile_m_eff, d_out_p), lambda i: (i, 0)),
        ),
        compiler_params=pltpu.CompilerParams(
            dimension_semantics=("parallel",)),
        cost_estimate=pl.CostEstimate(
            flops=flops, transcendentals=0, bytes_accessed=bytes_accessed),
    )(xp, w1p, b1p, w2p, b2p, w3p, b3p)

    return out_padded[:N, :d_out]


def init_params(key, input_dim, output_dim, hidden_dim1=32, hidden_dim2=16,
                eps=1e-5):
    """Deterministic synthetic parameters; BN (eval mode) folded into linears."""
    ks = jax.random.split(key, 14)

    def lin(kw, kb, fan_in, fan_out):
        bound = 1.0 / jnp.sqrt(fan_in)
        w = jax.random.uniform(kw, (fan_in, fan_out), jnp.float32, -bound, bound)
        b = jax.random.uniform(kb, (1, fan_out), jnp.float32, -bound, bound)
        return w, b

    w1, b1 = lin(ks[0], ks[1], input_dim, hidden_dim1)
    w2, b2 = lin(ks[2], ks[3], hidden_dim1, hidden_dim2)
    w3, b3 = lin(ks[4], ks[5], hidden_dim2, output_dim)

    def bn(kg, kb, km, kv, dim):
        gamma = 1.0 + 0.1 * jax.random.normal(kg, (dim,), jnp.float32)
        beta = 0.1 * jax.random.normal(kb, (dim,), jnp.float32)
        mean = 0.1 * jax.random.normal(km, (dim,), jnp.float32)
        var = jnp.abs(1.0 + 0.1 * jax.random.normal(kv, (dim,), jnp.float32))
        return gamma, beta, mean, var

    g1, be1, m1, v1 = bn(ks[6], ks[7], ks[8], ks[9], hidden_dim1)
    g2, be2, m2, v2 = bn(ks[10], ks[11], ks[12], ks[13], hidden_dim2)

    # Fold BN (eval): y = scale * z + shift, with z = x@W + b
    def fold(w, b, gamma, beta, mean, var):
        scale = gamma / jnp.sqrt(var + eps)       # [H]
        shift = beta - mean * scale               # [H]
        w_eff = w * scale[None, :]
        b_eff = b * scale[None, :] + shift[None, :]
        return w_eff, b_eff

    w1e, b1e = fold(w1, b1, g1, be1, m1, v1)
    w2e, b2e = fold(w2, b2, g2, be2, m2, v2)

    return {"w1": w1e, "b1": b1e, "w2": w2e, "b2": b2e, "w3": w3, "b3": b3}


def _reference(x, params, *, use_bf16):
    """Precision-matched pure-JAX reference (same casts, f32 accumulation)."""
    in_dtype = jnp.bfloat16 if use_bf16 else x.dtype
    w1, w2, w3 = (params[k].astype(in_dtype) for k in ("w1", "w2", "w3"))
    b1, b2, b3 = params["b1"], params["b2"], params["b3"]
    h = jnp.dot(x.astype(in_dtype), w1, preferred_element_type=jnp.float32)
    h = jnp.maximum(h + b1, 0.0).astype(in_dtype)
    h = jnp.dot(h, w2, preferred_element_type=jnp.float32)
    h = jnp.maximum(h + b2, 0.0).astype(in_dtype)
    return jnp.dot(h, w3, preferred_element_type=jnp.float32) + b3


if __name__ == "__main__":
    key = jax.random.PRNGKey(0)
    k_x, k_p = jax.random.split(key)

    N, input_dim, output_dim = 128, 64, 8   # small synthetic node set
    x = jax.random.normal(k_x, (N, input_dim), jnp.float32)
    params = init_params(k_p, input_dim, output_dim)

    # f32 path: exact check against the folded reference.
    logits_f32 = jax.block_until_ready(
        node_classifier_forward(x, params, use_bf16=False))
    ref_f32 = _reference(x, params, use_bf16=False)
    assert logits_f32.shape == (N, output_dim)
    assert jnp.allclose(logits_f32, ref_f32, atol=1e-4, rtol=1e-4), \
        "f32 mismatch vs reference"

    # bf16 fast path (v5e/v6e MXU full rate): precision-matched reference.
    logits_bf16 = jax.block_until_ready(
        node_classifier_forward(x, params, use_bf16=True))
    ref_bf16 = _reference(x, params, use_bf16=True)
    assert logits_bf16.shape == (N, output_dim)
    assert jnp.allclose(logits_bf16, ref_bf16, atol=1e-3, rtol=1e-3), \
        "bf16 mismatch vs reference"

    print("KERNEL_OK")
</pallas_src>

<mosaic_0001>
module attributes {stable_mosaic.version = 11 : i64} {
  func.func @_mlp_kernel(%arg0: i32, %arg1: memref<128x64xf32, #tpu.memory_space<vmem>>, %arg2: memref<64x128xf32, #tpu.memory_space<vmem>>, %arg3: memref<1x128xf32, #tpu.memory_space<vmem>>, %arg4: memref<128x128xf32, #tpu.memory_space<vmem>>, %arg5: memref<1x128xf32, #tpu.memory_space<vmem>>, %arg6: memref<128x128xf32, #tpu.memory_space<vmem>>, %arg7: memref<1x128xf32, #tpu.memory_space<vmem>>, %arg8: memref<128x128xf32, #tpu.memory_space<vmem>>) attributes {dimension_semantics = [#tpu.dimension_semantics<parallel>], iteration_bounds = array<i64: 1>, scalar_prefetch = 0 : i64, scratch_operands = 0 : i64, tpu.core_type = #tpu.core_type<tc>, window_params = [{transform_indices = @transform_0, window_bounds = array<i64: 128, 64>}, {pipeline_mode = #tpu.pipeline_mode<synchronous>, transform_indices = @transform_1, window_bounds = array<i64: 64, 128>}, {pipeline_mode = #tpu.pipeline_mode<synchronous>, transform_indices = @transform_2, window_bounds = array<i64: 1, 128>}, {pipeline_mode = #tpu.pipeline_mode<synchronous>, transform_indices = @transform_3, window_bounds = array<i64: 128, 128>}, {pipeline_mode = #tpu.pipeline_mode<synchronous>, transform_indices = @transform_4, window_bounds = array<i64: 1, 128>}, {pipeline_mode = #tpu.pipeline_mode<synchronous>, transform_indices = @transform_5, window_bounds = array<i64: 128, 128>}, {pipeline_mode = #tpu.pipeline_mode<synchronous>, transform_indices = @transform_6, window_bounds = array<i64: 1, 128>}, {transform_indices = @transform_7, window_bounds = array<i64: 128, 128>}]} {
    %c0 = arith.constant 0 : index
    %c0_0 = arith.constant 0 : index
    %0 = vector.load %arg2[%c0, %c0_0] : memref<64x128xf32, #tpu.memory_space<vmem>>, vector<64x128xf32>
    %c0_1 = arith.constant 0 : index
    %c0_2 = arith.constant 0 : index
    %1 = vector.load %arg4[%c0_1, %c0_2] : memref<128x128xf32, #tpu.memory_space<vmem>>, vector<128x128xf32>
    %c0_3 = arith.constant 0 : index
    %c0_4 = arith.constant 0 : index
    %2 = vector.load %arg6[%c0_3, %c0_4] : memref<128x128xf32, #tpu.memory_space<vmem>>, vector<128x128xf32>
    %c0_5 = arith.constant 0 : index
    %c0_6 = arith.constant 0 : index
    %3 = vector.load %arg3[%c0_5, %c0_6] : memref<1x128xf32, #tpu.memory_space<vmem>>, vector<1x128xf32>
    %c0_7 = arith.constant 0 : index
    %c0_8 = arith.constant 0 : index
    %4 = vector.load %arg5[%c0_7, %c0_8] : memref<1x128xf32, #tpu.memory_space<vmem>>, vector<1x128xf32>
    %c0_9 = arith.constant 0 : index
    %c0_10 = arith.constant 0 : index
    %5 = vector.load %arg7[%c0_9, %c0_10] : memref<1x128xf32, #tpu.memory_space<vmem>>, vector<1x128xf32>
    %c0_i32 = arith.constant 0 : i32
    %c128_i32 = arith.constant 128 : i32
    %6 = arith.muli %c0_i32, %c128_i32 : i32
    %7 = tpu.assume_multiple %6, 128 : i32
    %8 = arith.index_cast %7 : i32 to index
    %c0_11 = arith.constant 0 : index
    %9 = vector.load %arg1[%8, %c0_11] : memref<128x64xf32, #tpu.memory_space<vmem>>, vector<128x64xf32>
    %cst = arith.constant dense<0.000000e+00> : vector<128x128xf32>
    %10 = tpu.matmul %9, %0, %cst {dimension_numbers = #tpu.dot_dimension_numbers<[1], [0], [0], [1], [0, 0, 1, 1], [], []>} : vector<128x64xf32>, vector<64x128xf32>, vector<128x128xf32> -> vector<128x128xf32>
    %11 = vector.broadcast %3 : vector<1x128xf32> to vector<128x128xf32>
    %12 = arith.addf %10, %11 : vector<128x128xf32>
    %cst_12 = arith.constant 0.000000e+00 : f32
    %13 = vector.broadcast %cst_12 : f32 to vector<128x128xf32>
    %14 = arith.maximumf %12, %13 : vector<128x128xf32>
    %cst_13 = arith.constant dense<0.000000e+00> : vector<128x128xf32>
    %15 = tpu.matmul %14, %1, %cst_13 {dimension_numbers = #tpu.dot_dimension_numbers<[1], [0], [0], [1], [0, 0, 1, 1], [], []>} : vector<128x128xf32>, vector<128x128xf32>, vector<128x128xf32> -> vector<128x128xf32>
    %16 = vector.broadcast %4 : vector<1x128xf32> to vector<128x128xf32>
    %17 = arith.addf %15, %16 : vector<128x128xf32>
    %cst_14 = arith.constant 0.000000e+00 : f32
    %18 = vector.broadcast %cst_14 : f32 to vector<128x128xf32>
    %19 = arith.maximumf %17, %18 : vector<128x128xf32>
    %cst_15 = arith.constant dense<0.000000e+00> : vector<128x128xf32>
    %20 = tpu.matmul %19, %2, %cst_15 {dimension_numbers = #tpu.dot_dimension_numbers<[1], [0], [0], [1], [0, 0, 1, 1], [], []>} : vector<128x128xf32>, vector<128x128xf32>, vector<128x128xf32> -> vector<128x128xf32>
    %21 = vector.broadcast %5 : vector<1x128xf32> to vector<128x128xf32>
    %22 = arith.addf %20, %21 : vector<128x128xf32>
    %23 = arith.index_cast %7 : i32 to index
    %c0_16 = arith.constant 0 : index
    %24 = vector.load %arg8[%23, %c0_16] : memref<128x128xf32, #tpu.memory_space<vmem>>, vector<128x128xf32>
    tpu.vector_store %arg8[%23, %c0_16], %22 {strides = array<i32>} : memref<128x128xf32, #tpu.memory_space<vmem>>, vector<128x128xf32>,
    %c1_i32 = arith.constant 1 : i32
    return
  }
  func.func @transform_0(%arg0: i32) -> (i32, i32) {
    %c0_i32 = arith.constant 0 : i32
    %c0_i32_0 = arith.constant 0 : i32
    return %arg0, %c0_i32 : i32, i32
  }
  func.func @transform_1(%arg0: i32) -> (i32, i32) {
    %c0_i32 = arith.constant 0 : i32
    %c0_i32_0 = arith.constant 0 : i32
    %c0_i32_1 = arith.constant 0 : i32
    return %c0_i32, %c0_i32_0 : i32, i32
  }
  func.func @transform_2(%arg0: i32) -> (i32, i32) {
    %c0_i32 = arith.constant 0 : i32
    %c0_i32_0 = arith.constant 0 : i32
    %c0_i32_1 = arith.constant 0 : i32
    return %c0_i32, %c0_i32_0 : i32, i32
  }
  func.func @transform_3(%arg0: i32) -> (i32, i32) {
    %c0_i32 = arith.constant 0 : i32
    %c0_i32_0 = arith.constant 0 : i32
    %c0_i32_1 = arith.constant 0 : i32
    return %c0_i32, %c0_i32_0 : i32, i32
  }
  func.func @transform_4(%arg0: i32) -> (i32, i32) {
    %c0_i32 = arith.constant 0 : i32
    %c0_i32_0 = arith.constant 0 : i32
    %c0_i32_1 = arith.constant 0 : i32
    return %c0_i32, %c0_i32_0 : i32, i32
  }
  func.func @transform_5(%arg0: i32) -> (i32, i32) {
    %c0_i32 = arith.constant 0 : i32
    %c0_i32_0 = arith.constant 0 : i32
    %c0_i32_1 = arith.constant 0 : i32
    return %c0_i32, %c0_i32_0 : i32, i32
  }
  func.func @transform_6(%arg0: i32) -> (i32, i32) {
    %c0_i32 = arith.constant 0 : i32
    %c0_i32_0 = arith.constant 0 : i32
    %c0_i32_1 = arith.constant 0 : i32
    return %c0_i32, %c0_i32_0 : i32, i32
  }
  func.func @transform_7(%arg0: i32) -> (i32, i32) {
    %c0_i32 = arith.constant 0 : i32
    %c0_i32_0 = arith.constant 0 : i32
    return %arg0, %c0_i32 : i32, i32
  }
}

</mosaic_0001>

<llo_original>
// kernel: tpu_custom_call.1
$region0: #{tpu_custom_call.1}
  #allocation0 [shape = 'u32[]', space=smem, size = 0x4, offset = 0x4, fixed_abs, tag = 'smem constant byte address 0x4 - core index']
  #allocation1 [shape = 'u32[72,128]{1,0:T(1,128)}', space=vmem, size = 0x9000, scoped, tag = 'internal scratch']
  %s0 = inlined_call_operand.vmem [shape: f32[128,64], index: 0, kind: input, shape index: {}]
  %s1 = inlined_call_operand.vmem [shape: f32[64,128], index: 1, kind: input, shape index: {}]
  %s2 = inlined_call_operand.vmem [shape: f32[1,128], index: 2, kind: input, shape index: {}]
  %s3 = inlined_call_operand.vmem [shape: f32[128,128], index: 3, kind: input, shape index: {}]
  %s4 = inlined_call_operand.vmem [shape: f32[1,128], index: 4, kind: input, shape index: {}]
  %s5 = inlined_call_operand.hbm [shape: f32[128,128], index: 5, kind: input, shape index: {}]
  %s6 = inlined_call_operand.vmem [shape: f32[1,128], index: 6, kind: input, shape index: {}]
  %s7 = inlined_call_operand.hbm [shape: f32[128,128], index: 7, kind: output, shape index: {}]
  %s8 = sld [smem:[#allocation0]]
  $region42: #{tpu_custom_call.1} parent=0
    _
  %s10 = ssub.s32 1, %s8
  %s11 = scalar_select 0, %s10, %s8
  $region1: #{tpu_custom_call.1} parent=0
    #allocation2 [shape = 'u8[65536]{0}', space=vmem, size = 0x10000, scoped, tag = 'input window, operand 5, single buffered']
    #allocation3 [shape = 's32[1]{0}', space=sflag, size = 0x4, scoped, tag = 'scoped memory for tpu_custom_call.1']
    #allocation4 [shape = 's32[1]{0}', space=sflag, size = 0x4, scoped, tag = 'scoped memory for tpu_custom_call.1']
    #allocation5 [shape = 'u8[65536]{0}', space=vmem, size = 0x10000, scoped, tag = 'output window, operand 0, single buffered']
    %12 = vsyncpa [#allocation3], 0
    %13 = vsyncpa [#allocation4], 0
    // Predicated region
    $region2: #{tpu_custom_call.1} parent=1 // pred_check
      _
    $region3: #{tpu_custom_call.1} parent=1 // pred_check_branch
      %15 = sbr.rel (0) target = $region5
    $region4: #{tpu_custom_call.1} parent=1 // pred_region
      _
    $region5: #{tpu_custom_call.1} parent=1 // pred_fallthru
      _
    // Predicated region
    $region6: #{tpu_custom_call.1} parent=1 // pred_check
      _
    $region7: #{tpu_custom_call.1} parent=1 // pred_check_branch
      %17 = sbr.rel (0) target = $region9
    $region8: #{tpu_custom_call.1} parent=1 // pred_region
      _
    $region9: #{tpu_custom_call.1} parent=1 // pred_fallthru
      _
    // Predicated region
    $region10: #{tpu_custom_call.1} parent=1 // pred_check
      _
    $region11: #{tpu_custom_call.1} parent=1 // pred_check_branch
      %19 = sbr.rel (0) target = $region13
    $region12: #{tpu_custom_call.1} parent=1 // pred_region
      _
    $region13: #{tpu_custom_call.1} parent=1 // pred_fallthru
      _
    // Predicated region
    $region14: #{tpu_custom_call.1} parent=1 // pred_check
      _
    $region15: #{tpu_custom_call.1} parent=1 // pred_check_branch
      %21 = sbr.rel (0) target = $region17
    $region16: #{tpu_custom_call.1} parent=1 // pred_region
      _
    $region17: #{tpu_custom_call.1} parent=1 // pred_fallthru
      _
    // Predicated region
    $region18: #{tpu_custom_call.1} parent=1 // pred_check
      _
    $region19: #{tpu_custom_call.1} parent=1 // pred_check_branch
      %23 = sbr.rel (0) target = $region21
    $region20: #{tpu_custom_call.1} parent=1 // pred_region
      _
    $region21: #{tpu_custom_call.1} parent=1 // pred_fallthru
      _
    // Predicated region
    $region22: #{tpu_custom_call.1} parent=1 // pred_check
      _
    $region23: #{tpu_custom_call.1} parent=1 // pred_check_branch
      %25 = sbr.rel (0) target = $region25
    $region24: #{tpu_custom_call.1} parent=1 // pred_region
      %27 = vsyncadd [#allocation3], 0
      %s28 = sshll.u32 %s5, 4
      %s29 = int_to_ptr.hbm [resolvable:$true] %s28
      %s30 = sshll.u32 [#allocation2], 4
      %s31 = int_to_ptr.vmem [resolvable:$true] %s30
      %36 = dma.hbm_to_vmem [thread:$0]  %s29, 2048, %s31, [#allocation3], 128, 128, 8
    $region25: #{tpu_custom_call.1} parent=1 // pred_fallthru
      _
    // Predicated region
    $region26: #{tpu_custom_call.1} parent=1 // pred_check
      _
    $region27: #{tpu_custom_call.1} parent=1 // pred_check_branch
      %38 = sbr.rel (0) target = $region29
    $region28: #{tpu_custom_call.1} parent=1 // pred_region
      _
    $region29: #{tpu_custom_call.1} parent=1 // pred_fallthru
      _
    // Predicated region
    $region30: #{tpu_custom_call.1} parent=1 // pred_check
      _
    $region31: #{tpu_custom_call.1} parent=1 // pred_check_branch
      %40 = sbr.rel (0) target = $region33
    $region32: #{tpu_custom_call.1} parent=1 // pred_region
      %42 = dma.done [#allocation3], 2048
    $region33: #{tpu_custom_call.1} parent=1 // pred_fallthru
      _
    %v43 = vld [vmem:[%s1] sm:$0xff]
    %v44 = vld [vmem:[%s1 + $0x8] sm:$0xff]
    %v45 = vld [vmem:[%s1 + $0x10] sm:$0xff]
    %v46 = vld [vmem:[%s1 + $0x18] sm:$0xff]
    %v47 = vld [vmem:[%s1 + $0x20] sm:$0xff]
    %v48 = vld [vmem:[%s1 + $0x28] sm:$0xff]
    %v49 = vld [vmem:[%s1 + $0x30] sm:$0xff]
    %v50 = vld [vmem:[%s1 + $0x38] sm:$0xff]
    %v51 = vld [vmem:[%s3] sm:$0xff]
    %v52 = vld [vmem:[%s3 + $0x8] sm:$0xff]
    %v53 = vld [vmem:[%s3 + $0x10] sm:$0xff]
    %v54 = vld [vmem:[%s3 + $0x18] sm:$0xff]
    %v55 = vld [vmem:[%s3 + $0x20] sm:$0xff]
    %v56 = vld [vmem:[%s3 + $0x28] sm:$0xff]
    %v57 = vld [vmem:[%s3 + $0x30] sm:$0xff]
    %v58 = vld [vmem:[%s3 + $0x38] sm:$0xff]
    %v59 = vld [vmem:[%s3 + $0x40] sm:$0xff]
    %v60 = vld [vmem:[%s3 + $0x48] sm:$0xff]
    %v61 = vld [vmem:[%s3 + $0x50] sm:$0xff]
    %v62 = vld [vmem:[%s3 + $0x58] sm:$0xff]
    %v63 = vld [vmem:[%s3 + $0x60] sm:$0xff]
    %v64 = vld [vmem:[%s3 + $0x68] sm:$0xff]
    %v65 = vld [vmem:[%s3 + $0x70] sm:$0xff]
    %v66 = vld [vmem:[%s3 + $0x78] sm:$0xff]
    %v67 = vld [vmem:[#allocation2] sm:$0xff]
    %v68 = vld [vmem:[#allocation2 + $0x8] sm:$0xff]
    %v69 = vld [vmem:[#allocation2 + $0x10] sm:$0xff]
    %v70 = vld [vmem:[#allocation2 + $0x18] sm:$0xff]
    %v71 = vld [vmem:[#allocation2 + $0x20] sm:$0xff]
    %v72 = vld [vmem:[#allocation2 + $0x28] sm:$0xff]
    %v73 = vld [vmem:[#allocation2 + $0x30] sm:$0xff]
    %v74 = vld [vmem:[#allocation2 + $0x38] sm:$0xff]
    %v75 = vld [vmem:[#allocation2 + $0x40] sm:$0xff]
    %v76 = vld [vmem:[#allocation2 + $0x48] sm:$0xff]
    %v77 = vld [vmem:[#allocation2 + $0x50] sm:$0xff]
    %v78 = vld [vmem:[#allocation2 + $0x58] sm:$0xff]
    %v79 = vld [vmem:[#allocation2 + $0x60] sm:$0xff]
    %v80 = vld [vmem:[#allocation2 + $0x68] sm:$0xff]
    %v81 = vld [vmem:[#allocation2 + $0x70] sm:$0xff]
    %v82 = vld [vmem:[#allocation2 + $0x78] sm:$0xff]
    %v83 = vld [vmem:[%s2] sm:$0x1]
    %v84 = vld [vmem:[%s4] sm:$0x1]
    %v85 = vld [vmem:[%s6] sm:$0x1]
    %v86 = vld [vmem:[%s0] sm:$0xff]
    %v87 = vld [vmem:[%s0 + $0x8] sm:$0xff]
    %v88 = vld [vmem:[%s0 + $0x10] sm:$0xff]
    %v89 = vld [vmem:[%s0 + $0x18] sm:$0xff]
    %v90 = vld [vmem:[%s0 + $0x20] sm:$0xff]
    %v91 = vld [vmem:[%s0 + $0x28] sm:$0xff]
    %v92 = vld [vmem:[%s0 + $0x30] sm:$0xff]
    %v93 = vld [vmem:[%s0 + $0x38] sm:$0xff]
    %v94 = vld [vmem:[%s0 + $0x40] sm:$0xff]
    %v95 = vld [vmem:[%s0 + $0x48] sm:$0xff]
    %v96 = vld [vmem:[%s0 + $0x50] sm:$0xff]
    %v97 = vld [vmem:[%s0 + $0x58] sm:$0xff]
    %v98 = vld [vmem:[%s0 + $0x60] sm:$0xff]
    %v99 = vld [vmem:[%s0 + $0x68] sm:$0xff]
    %v100 = vld [vmem:[%s0 + $0x70] sm:$0xff]
    %v101 = vld [vmem:[%s0 + $0x78] sm:$0xff]
    %v103 = vperm.slane %v83, 0
    %vm105 = vcmask 523264
    %v107 = vsel %vm105, %v86, 0
    %v110 = vsel %vm105, %v87, 0
    %v113 = vsel %vm105, %v88, 0
    %v116 = vsel %vm105, %v89, 0
    %v119 = vsel %vm105, %v90, 0
    %v122 = vsel %vm105, %v91, 0
    %v125 = vsel %vm105, %v92, 0
    %v128 = vsel %vm105, %v93, 0
    %v131 = vsel %vm105, %v94, 0
    %v134 = vsel %vm105, %v95, 0
    %v137 = vsel %vm105, %v96, 0
    %v140 = vsel %vm105, %v97, 0
    %v143 = vsel %vm105, %v98, 0
    %v146 = vsel %vm105, %v99, 0
    %v149 = vsel %vm105, %v100, 0
    %v152 = vsel %vm105, %v101, 0
    %154 = vmatpush.msra.mxu0 0.0
    %155 = vmatpush.msra.mxu0 0.0
    %156 = vmatpush.msra.mxu0 0.0
    %157 = vmatpush.msra.mxu0 0.0
    %158 = vmatpush.msra.mxu0 0.0
    %159 = vmatpush.msra.mxu0 0.0
    %160 = vmatpush.msra.mxu0 0.0
    %161 = vmatpush.msra.mxu0 0.0
    %162 = vmatpush.msra.mxu0 %v50
    %163 = vmatpush.msra.mxu0 %v49
    %164 = vmatpush.msra.mxu0 %v48
    %165 = vmatpush.msra.mxu0 %v47
    %166 = vmatpush.msra.mxu0 %v46
    %167 = vmatpush.msra.mxu0 %v45
    %168 = vmatpush.msra.mxu0 %v44
    %169 = vmatpush.msra.mxu0 %v43
    %170 = vmatmul.f32.gmra.mxu0 %v107
    %v171 = vpop.f32.mrf.mxu0
    %v172 = vadd.f32 %v103, %v171
    %173 = vmatmul.f32.gmra.mxu0 %v110
    %v174 = vpop.f32.mrf.mxu0
    %v175 = vadd.f32 %v103, %v174
    %176 = vmatmul.f32.gmra.mxu0 %v113
    %v177 = vpop.f32.mrf.mxu0
    %v178 = vadd.f32 %v103, %v177
    %179 = vmatmul.f32.gmra.mxu0 %v116
    %v180 = vpop.f32.mrf.mxu0
    %v181 = vadd.f32 %v103, %v180
    %182 = vmatmul.f32.gmra.mxu0 %v119
    %v183 = vpop.f32.mrf.mxu0
    %v184 = vadd.f32 %v103, %v183
    %185 = vmatmul.f32.gmra.mxu0 %v122
    %v186 = vpop.f32.mrf.mxu0
    %v187 = vadd.f32 %v103, %v186
    %188 = vmatmul.f32.gmra.mxu0 %v125
    %v189 = vpop.f32.mrf.mxu0
    %v190 = vadd.f32 %v103, %v189
    %191 = vmatmul.f32.gmra.mxu0 %v128
    %v192 = vpop.f32.mrf.mxu0
    %v193 = vadd.f32 %v103, %v192
    %194 = vmatmul.f32.gmra.mxu0 %v131
    %v195 = vpop.f32.mrf.mxu0
    %v196 = vadd.f32 %v103, %v195
    %197 = vmatmul.f32.gmra.mxu0 %v134
    %v198 = vpop.f32.mrf.mxu0
    %v199 = vadd.f32 %v103, %v198
    %200 = vmatmul.f32.gmra.mxu0 %v137
    %v201 = vpop.f32.mrf.mxu0
    %v202 = vadd.f32 %v103, %v201
    %203 = vmatmul.f32.gmra.mxu0 %v140
    %v204 = vpop.f32.mrf.mxu0
    %v205 = vadd.f32 %v103, %v204
    %206 = vmatmul.f32.gmra.mxu0 %v143
    %v207 = vpop.f32.mrf.mxu0
    %v208 = vadd.f32 %v103, %v207
    %209 = vmatmul.f32.gmra.mxu0 %v146
    %v210 = vpop.f32.mrf.mxu0
    %v211 = vadd.f32 %v103, %v210
    %212 = vmatmul.f32.gmra.mxu0 %v149
    %v213 = vpop.f32.mrf.mxu0
    %v214 = vadd.f32 %v103, %v213
    %215 = vmatmul.f32.gmra.mxu0 %v152
    %v216 = vpop.f32.mrf.mxu0
    %v217 = vadd.f32 %v103, %v216
    %218 = vdwg.mxu0
    %v219 = vmax.f32 %v172, 0.0
    %v220 = vmax.f32 %v175, 0.0
    %v221 = vmax.f32 %v178, 0.0
    %v222 = vmax.f32 %v181, 0.0
    %v223 = vmax.f32 %v184, 0.0
    %v224 = vmax.f32 %v187, 0.0
    %v225 = vmax.f32 %v190, 0.0
    %v226 = vmax.f32 %v193, 0.0
    %v227 = vmax.f32 %v196, 0.0
    %v228 = vmax.f32 %v199, 0.0
    %v229 = vmax.f32 %v202, 0.0
    %v230 = vmax.f32 %v205, 0.0
    %v231 = vmax.f32 %v208, 0.0
    %v232 = vmax.f32 %v211, 0.0
    %v233 = vmax.f32 %v214, 0.0
    %v234 = vmax.f32 %v217, 0.0
    %v236 = vperm.slane %v84, 0
    %238 = vmatpush.msra.mxu0 %v66
    %239 = vmatpush.msra.mxu0 %v65
    %240 = vmatpush.msra.mxu0 %v64
    %241 = vmatpush.msra.mxu0 %v63
    %242 = vmatpush.msra.mxu0 %v62
    %243 = vmatpush.msra.mxu0 %v61
    %244 = vmatpush.msra.mxu0 %v60
    %245 = vmatpush.msra.mxu0 %v59
    %246 = vmatpush.msra.mxu0 %v58
    %247 = vmatpush.msra.mxu0 %v57
    %248 = vmatpush.msra.mxu0 %v56
    %249 = vmatpush.msra.mxu0 %v55
    %250 = vmatpush.msra.mxu0 %v54
    %251 = vmatpush.msra.mxu0 %v53
    %252 = vmatpush.msra.mxu0 %v52
    %253 = vmatpush.msra.mxu0 %v51
    %254 = vmatmul.f32.gmra.mxu0 %v219
    %v255 = vpop.f32.mrf.mxu0
    %v256 = vadd.f32 %v236, %v255
    %257 = vmatmul.f32.gmra.mxu0 %v220
    %v258 = vpop.f32.mrf.mxu0
    %v259 = vadd.f32 %v236, %v258
    %260 = vmatmul.f32.gmra.mxu0 %v221
    %v261 = vpop.f32.mrf.mxu0
    %v262 = vadd.f32 %v236, %v261
    %263 = vmatmul.f32.gmra.mxu0 %v222
    %v264 = vpop.f32.mrf.mxu0
    %v265 = vadd.f32 %v236, %v264
    %266 = vmatmul.f32.gmra.mxu0 %v223
    %v267 = vpop.f32.mrf.mxu0
    %v268 = vadd.f32 %v236, %v267
    %269 = vmatmul.f32.gmra.mxu0 %v224
    %v270 = vpop.f32.mrf.mxu0
    %v271 = vadd.f32 %v236, %v270
    %272 = vmatmul.f32.gmra.mxu0 %v225
    %v273 = vpop.f32.mrf.mxu0
    %v274 = vadd.f32 %v236, %v273
    %275 = vmatmul.f32.gmra.mxu0 %v226
    %v276 = vpop.f32.mrf.mxu0
    %v277 = vadd.f32 %v236, %v276
    %278 = vmatmul.f32.gmra.mxu0 %v227
    %v279 = vpop.f32.mrf.mxu0
    %v280 = vadd.f32 %v236, %v279
    %281 = vmatmul.f32.gmra.mxu0 %v228
    %v282 = vpop.f32.mrf.mxu0
    %v283 = vadd.f32 %v236, %v282
    %284 = vmatmul.f32.gmra.mxu0 %v229
    %v285 = vpop.f32.mrf.mxu0
    %v286 = vadd.f32 %v236, %v285
    %287 = vmatmul.f32.gmra.mxu0 %v230
    %v288 = vpop.f32.mrf.mxu0
    %v289 = vadd.f32 %v236, %v288
    %290 = vmatmul.f32.gmra.mxu0 %v231
    %v291 = vpop.f32.mrf.mxu0
    %v292 = vadd.f32 %v236, %v291
    %293 = vmatmul.f32.gmra.mxu0 %v232
    %v294 = vpop.f32.mrf.mxu0
    %v295 = vadd.f32 %v236, %v294
    %296 = vmatmul.f32.gmra.mxu0 %v233
    %v297 = vpop.f32.mrf.mxu0
    %v298 = vadd.f32 %v236, %v297
    %299 = vmatmul.f32.gmra.mxu0 %v234
    %v300 = vpop.f32.mrf.mxu0
    %v301 = vadd.f32 %v236, %v300
    %302 = vdwg.mxu0
    %v303 = vmax.f32 %v256, 0.0
    %v304 = vmax.f32 %v259, 0.0
    %v305 = vmax.f32 %v262, 0.0
    %v306 = vmax.f32 %v265, 0.0
    %v307 = vmax.f32 %v268, 0.0
    %v308 = vmax.f32 %v271, 0.0
    %v309 = vmax.f32 %v274, 0.0
    %v310 = vmax.f32 %v277, 0.0
    %v311 = vmax.f32 %v280, 0.0
    %v312 = vmax.f32 %v283, 0.0
    %v313 = vmax.f32 %v286, 0.0
    %v314 = vmax.f32 %v289, 0.0
    %v315 = vmax.f32 %v292, 0.0
    %v316 = vmax.f32 %v295, 0.0
    %v317 = vmax.f32 %v298, 0.0
    %v318 = vmax.f32 %v301, 0.0
    %v320 = vperm.slane %v85, 0
    %322 = vmatpush.msra.mxu0 %v82
    %323 = vmatpush.msra.mxu0 %v81
    %324 = vmatpush.msra.mxu0 %v80
    %325 = vmatpush.msra.mxu0 %v79
    %326 = vmatpush.msra.mxu0 %v78
    %327 = vmatpush.msra.mxu0 %v77
    %328 = vmatpush.msra.mxu0 %v76
    %329 = vmatpush.msra.mxu0 %v75
    %330 = vmatpush.msra.mxu0 %v74
    %331 = vmatpush.msra.mxu0 %v73
    %332 = vmatpush.msra.mxu0 %v72
    %333 = vmatpush.msra.mxu0 %v71
    %334 = vmatpush.msra.mxu0 %v70
    %335 = vmatpush.msra.mxu0 %v69
    %336 = vmatpush.msra.mxu0 %v68
    %337 = vmatpush.msra.mxu0 %v67
    %338 = vmatmul.f32.gmra.mxu0 %v303
    %v339 = vpop.f32.mrf.mxu0
    %v340 = vadd.f32 %v320, %v339
    %341 = vmatmul.f32.gmra.mxu0 %v304
    %v342 = vpop.f32.mrf.mxu0
    %v343 = vadd.f32 %v320, %v342
    %344 = vmatmul.f32.gmra.mxu0 %v305
    %v345 = vpop.f32.mrf.mxu0
    %v346 = vadd.f32 %v320, %v345
    %347 = vmatmul.f32.gmra.mxu0 %v306
    %v348 = vpop.f32.mrf.mxu0
    %v349 = vadd.f32 %v320, %v348
    %350 = vmatmul.f32.gmra.mxu0 %v307
    %v351 = vpop.f32.mrf.mxu0
    %v352 = vadd.f32 %v320, %v351
    %353 = vmatmul.f32.gmra.mxu0 %v308
    %v354 = vpop.f32.mrf.mxu0
    %v355 = vadd.f32 %v320, %v354
    %356 = vmatmul.f32.gmra.mxu0 %v309
    %v357 = vpop.f32.mrf.mxu0
    %v358 = vadd.f32 %v320, %v357
    %359 = vmatmul.f32.gmra.mxu0 %v310
    %v360 = vpop.f32.mrf.mxu0
    %v361 = vadd.f32 %v320, %v360
    %362 = vmatmul.f32.gmra.mxu0 %v311
    %v363 = vpop.f32.mrf.mxu0
    %v364 = vadd.f32 %v320, %v363
    %365 = vmatmul.f32.gmra.mxu0 %v312
    %v366 = vpop.f32.mrf.mxu0
    %v367 = vadd.f32 %v320, %v366
    %368 = vmatmul.f32.gmra.mxu0 %v313
    %v369 = vpop.f32.mrf.mxu0
    %v370 = vadd.f32 %v320, %v369
    %371 = vmatmul.f32.gmra.mxu0 %v314
    %v372 = vpop.f32.mrf.mxu0
    %v373 = vadd.f32 %v320, %v372
    %374 = vmatmul.f32.gmra.mxu0 %v315
    %v375 = vpop.f32.mrf.mxu0
    %v376 = vadd.f32 %v320, %v375
    %377 = vmatmul.f32.gmra.mxu0 %v316
    %v378 = vpop.f32.mrf.mxu0
    %v379 = vadd.f32 %v320, %v378
    %380 = vmatmul.f32.gmra.mxu0 %v317
    %v381 = vpop.f32.mrf.mxu0
    %v382 = vadd.f32 %v320, %v381
    %383 = vmatmul.f32.gmra.mxu0 %v318
    %v384 = vpop.f32.mrf.mxu0
    %v385 = vadd.f32 %v320, %v384
    %386 = vdwg.mxu0
    %387 = vst [vmem:[#allocation5] sm:$0xff] %v340
    %388 = vst [vmem:[#allocation5 + $0x8] sm:$0xff] %v343
    %389 = vst [vmem:[#allocation5 + $0x10] sm:$0xff] %v346
    %390 = vst [vmem:[#allocation5 + $0x18] sm:$0xff] %v349
    %391 = vst [vmem:[#allocation5 + $0x20] sm:$0xff] %v352
    %392 = vst [vmem:[#allocation5 + $0x28] sm:$0xff] %v355
    %393 = vst [vmem:[#allocation5 + $0x30] sm:$0xff] %v358
    %394 = vst [vmem:[#allocation5 + $0x38] sm:$0xff] %v361
    %395 = vst [vmem:[#allocation5 + $0x40] sm:$0xff] %v364
    %396 = vst [vmem:[#allocation5 + $0x48] sm:$0xff] %v367
    %397 = vst [vmem:[#allocation5 + $0x50] sm:$0xff] %v370
    %398 = vst [vmem:[#allocation5 + $0x58] sm:$0xff] %v373
    %399 = vst [vmem:[#allocation5 + $0x60] sm:$0xff] %v376
    %400 = vst [vmem:[#allocation5 + $0x68] sm:$0xff] %v379
    %401 = vst [vmem:[#allocation5 + $0x70] sm:$0xff] %v382
    %402 = vst [vmem:[#allocation5 + $0x78] sm:$0xff] %v385
    // Predicated region
    $region34: #{tpu_custom_call.1} parent=1 // pred_check
      _
    $region35: #{tpu_custom_call.1} parent=1 // pred_check_branch
      %404 = sbr.rel (0) target = $region37
    $region36: #{tpu_custom_call.1} parent=1 // pred_region
      %406 = vsyncadd [#allocation4], 0
      %s407 = sshll.u32 [#allocation5], 4
      %s408 = int_to_ptr.vmem [resolvable:$true] %s407
      %s409 = sshll.u32 %s7, 4
      %s410 = int_to_ptr.hbm [resolvable:$true] %s409
      %415 = dma.vmem_to_hbm [thread:$0]  %s408, 2048, %s410, [#allocation4], 128, 128, 8
    $region37: #{tpu_custom_call.1} parent=1 // pred_fallthru
      _
    // Predicated region
    $region38: #{tpu_custom_call.1} parent=1 // pred_check
      _
    $region39: #{tpu_custom_call.1} parent=1 // pred_check_branch
      %417 = sbr.rel (0) target = $region41
    $region40: #{tpu_custom_call.1} parent=1 // pred_region
      %419 = dma.done [#allocation4], 2048
    $region41: #{tpu_custom_call.1} parent=1 // pred_fallthru
      _
    %420 = vsyncpa [#allocation3], 1
    %421 = vsyncpa [#allocation4], 1

</llo_original>
